<compile_context>
chip_gen: v7x
topology: tpu7x:2x2x1
jax: 0.10.0
libtpu: 0.0.40
codegen_flags: <defaults>
</compile_context>

<pallas_src>
import jax
import jax.numpy as jnp
from jax.experimental import pallas as pl
from jax.experimental.pallas import tpu as pltpu

# ----------------------------- problem sizes -------------------------------
ONEHOT_DIM = 32   # onehot_dim
CLASS_NUM = 8     # class_num
BATCH = 2
SEQ = 8

_VMEM = pltpu.MemorySpace.VMEM


# ------------------------------ Pallas kernels -----------------------------
def _predict_kernel(x_ref, wb_ref, out_ref):
    """Inference: argmax over classes of the mean-over-seq logits.

    x_ref   : (B, S, D) f32   VMEM
    wb_ref  : (D+1, C)  f32   VMEM  rows [0:D] = composed weight (1/SEQ folded
                                    in), row [D] = composed bias
    out_ref : (B, 1)    int32 VMEM  argmax class per batch row
    """
    xs = jnp.sum(x_ref[...], axis=1)                       # (B, D) XLU sublane sum
    w = wb_ref[:ONEHOT_DIM, :]                             # (D, C) static slice
    b = wb_ref[ONEHOT_DIM:, :]                             # (1, C) static slice
    logits = jnp.dot(xs, w, preferred_element_type=jnp.float32) + b   # (B, C)
    m = jnp.max(logits, axis=-1, keepdims=True)            # (B, 1)
    idx = jax.lax.broadcasted_iota(jnp.int32, logits.shape, 1)
    # first occurrence of the max (matches jnp/torch argmax tie-break)
    arg = jnp.min(jnp.where(logits == m, idx, CLASS_NUM), axis=-1, keepdims=True)
    out_ref[...] = arg


def _loss_kernel(x_ref, wb_ref, label_ref, out_ref):
    """Training: CrossEntropyLoss(mean-over-seq logits, label).

    x_ref     : (B, S, D) f32   VMEM
    wb_ref    : (D+1, C)  f32   VMEM
    label_ref : (B, 1)    int32 VMEM
    out_ref   : (1, 1)    f32   VMEM  mean NLL over the batch
    """
    xs = jnp.sum(x_ref[...], axis=1)                       # (B, D)
    w = wb_ref[:ONEHOT_DIM, :]
    b = wb_ref[ONEHOT_DIM:, :]
    logits = jnp.dot(xs, w, preferred_element_type=jnp.float32) + b   # (B, C)
    m = jnp.max(logits, axis=-1, keepdims=True)                       # (B, 1)
    lse = m + jnp.log(jnp.sum(jnp.exp(logits - m), axis=-1, keepdims=True))
    idx = jax.lax.broadcasted_iota(jnp.int32, logits.shape, 1)
    onehot = (idx == label_ref[...]).astype(jnp.float32)              # (B, C)
    picked = jnp.sum(onehot * logits, axis=-1, keepdims=True)         # (B, 1)
    nll = lse - picked                                                # (B, 1)
    inv_b = 1.0 / x_ref.shape[0]                                      # static
    out_ref[...] = jnp.sum(nll, axis=0, keepdims=True) * inv_b        # (1, 1)


# -------------------- fused forward paths (one dispatch each) --------------
@jax.jit
def _predict(x, wb):
    B = x.shape[0]
    out = pl.pallas_call(
        _predict_kernel,
        out_shape=jax.ShapeDtypeStruct((B, 1), jnp.int32),
        in_specs=[pl.BlockSpec(memory_space=_VMEM)] * 2,
        out_specs=pl.BlockSpec(memory_space=_VMEM),
    )(x, wb)
    return out[:, 0]                                       # (B,)


@jax.jit
def _ce_loss(x, label, wb):
    B = x.shape[0]
    out = pl.pallas_call(
        _loss_kernel,
        out_shape=jax.ShapeDtypeStruct((1, 1), jnp.float32),
        in_specs=[pl.BlockSpec(memory_space=_VMEM)] * 3,
        out_specs=pl.BlockSpec(memory_space=_VMEM),
    )(x, wb, label.astype(jnp.int32).reshape(B, 1))
    return out[0, 0]                                       # scalar


# ------------------------------ Model wrapper ------------------------------
class Model:
    """JAX/Pallas port of the PyTorch Model (W1: D->D, W2: D->C, mean over seq)."""

    def __init__(self, key):
        k1, k2, k3, k4 = jax.random.split(key, 4)
        # Mirror nn.Linear's U(-1/sqrt(fan_in), 1/sqrt(fan_in)) init;
        # weights stored as (in, out) -- transposed relative to torch's (out, in).
        bound1 = 1.0 / jnp.sqrt(ONEHOT_DIM)
        bound2 = 1.0 / jnp.sqrt(ONEHOT_DIM)
        self.w1 = jax.random.uniform(k1, (ONEHOT_DIM, ONEHOT_DIM),
                                     jnp.float32, -bound1, bound1)
        self.b1 = jax.random.uniform(k2, (1, ONEHOT_DIM),
                                     jnp.float32, -bound1, bound1)
        self.w2 = jax.random.uniform(k3, (ONEHOT_DIM, CLASS_NUM),
                                     jnp.float32, -bound2, bound2)
        self.b2 = jax.random.uniform(k4, (1, CLASS_NUM),
                                     jnp.float32, -bound2, bound2)

        # Compose the two affine layers (exact: no nonlinearity between them),
        # fold the 1/SEQ of the sequence mean into the weight, and pack
        # weight + bias into one (D+1, C) operand for the kernel.
        # NOTE: the 1/SEQ fold assumes inputs with seq length == SEQ.
        w_comp = jnp.dot(self.w1, self.w2) / SEQ                      # (D, C)
        b_comp = jnp.dot(self.b1, self.w2) + self.b2                  # (1, C)
        self.wb = jnp.concatenate([w_comp, b_comp], axis=0)           # (D+1, C)

    def __call__(self, x, label=None):
        if label is not None:
            return _ce_loss(x, label, self.wb)
        return _predict(x, self.wb)


# ------------------------------ reference check ----------------------------
def _ref_forward(x, w1, b1, w2, b2, label=None):
    # Original op order: two Linears on (B, S, D), then mean over seq.
    h = jnp.einsum("bsd,de->bse", x, w1) + b1[0]
    logits = jnp.einsum("bse,ec->bsc", h, w2) + b2[0]
    pre = jnp.mean(logits, axis=1)                                    # (B, C)
    if label is None:
        return jnp.argmax(pre, axis=-1)
    logp = jax.nn.log_softmax(pre, axis=-1)
    nll = -jnp.take_along_axis(logp, label[:, None], axis=-1)[:, 0]
    return jnp.mean(nll)


if __name__ == "__main__":
    key = jax.random.PRNGKey(0)
    kx, kl, kp = jax.random.split(key, 3)

    x = jax.random.normal(kx, (BATCH, SEQ, ONEHOT_DIM), jnp.float32)
    label = jax.random.randint(kl, (BATCH,), 0, CLASS_NUM, jnp.int32)

    model = Model(kp)

    # Inference path: argmax over classes of mean-over-seq logits.
    preds = jax.block_until_ready(model(x))
    # Training path: cross-entropy loss.
    loss = jax.block_until_ready(model(x, label))

    # Sanity-check against the pure-JAX reference with the ORIGINAL op order
    # (matmul-before-mean, uncomposed layers); differences are only f32
    # rounding order.
    want_preds = _ref_forward(x, model.w1, model.b1, model.w2, model.b2)
    want_loss = _ref_forward(x, model.w1, model.b1, model.w2, model.b2, label)

    assert preds.shape == (BATCH,)
    assert loss.shape == ()
    assert bool(jnp.all(preds == want_preds)), "argmax mismatch"
    assert jnp.allclose(loss, want_loss, atol=1e-5, rtol=1e-5), "loss mismatch"

    print("KERNEL_OK")
</pallas_src>

<mosaic_0001>
module attributes {stable_mosaic.version = 11 : i64} {
  func.func @_predict_kernel(%arg0: memref<2x8x32xf32, #tpu.memory_space<vmem>>, %arg1: memref<33x8xf32, #tpu.memory_space<vmem>>, %arg2: memref<2x1xi32, #tpu.memory_space<vmem>>) attributes {dimension_semantics = [], scalar_prefetch = 0 : i64, scratch_operands = 0 : i64, tpu.core_type = #tpu.core_type<tc>} {
    %c0 = arith.constant 0 : index
    %c0_0 = arith.constant 0 : index
    %c0_1 = arith.constant 0 : index
    %0 = vector.load %arg0[%c0, %c0_0, %c0_1] : memref<2x8x32xf32, #tpu.memory_space<vmem>>, vector<2x8x32xf32>
    %cst = arith.constant dense<0.000000e+00> : vector<2x32xf32>
    %1 = vector.multi_reduction <add>, %0, %cst [1] : vector<2x8x32xf32> to vector<2x32xf32>
    %c0_2 = arith.constant 0 : index
    %c0_3 = arith.constant 0 : index
    %2 = vector.load %arg1[%c0_2, %c0_3] : memref<33x8xf32, #tpu.memory_space<vmem>>, vector<32x8xf32>
    %c32 = arith.constant 32 : index
    %c0_4 = arith.constant 0 : index
    %3 = vector.load %arg1[%c32, %c0_4] : memref<33x8xf32, #tpu.memory_space<vmem>>, vector<1x8xf32>
    %cst_5 = arith.constant dense<0.000000e+00> : vector<2x8xf32>
    %4 = tpu.matmul %1, %2, %cst_5 {dimension_numbers = #tpu.dot_dimension_numbers<[1], [0], [0], [1], [0, 0, 1, 1], [], []>} : vector<2x32xf32>, vector<32x8xf32>, vector<2x8xf32> -> vector<2x8xf32>
    %5 = vector.broadcast %3 : vector<1x8xf32> to vector<2x8xf32>
    %6 = arith.addf %4, %5 : vector<2x8xf32>
    %cst_6 = arith.constant dense<0xFF800000> : vector<2xf32>
    %7 = vector.multi_reduction <maximumf>, %6, %cst_6 [1] : vector<2x8xf32> to vector<2xf32>
    %8 = vector.shape_cast %7 : vector<2xf32> to vector<2x1xf32>
    %9 = tpu.iota {dimensions = array<i32: 1>} : vector<2x8xi32>
    %10 = vector.broadcast %8 : vector<2x1xf32> to vector<2x8xf32>
    %11 = arith.cmpf oeq, %6, %10 : vector<2x8xf32>
    %c8_i32 = arith.constant 8 : i32
    %12 = vector.broadcast %c8_i32 : i32 to vector<2x8xi32>
    %13 = arith.select %11, %9, %12 : vector<2x8xi1>, vector<2x8xi32>
    %cst_7 = arith.constant dense<2147483647> : vector<2xi32>
    %14 = vector.multi_reduction <minsi>, %13, %cst_7 [1] : vector<2x8xi32> to vector<2xi32>
    %15 = vector.shape_cast %14 : vector<2xi32> to vector<2x1xi32>
    %c0_8 = arith.constant 0 : index
    %c0_9 = arith.constant 0 : index
    %16 = vector.load %arg2[%c0_8, %c0_9] : memref<2x1xi32, #tpu.memory_space<vmem>>, vector<2x1xi32>
    tpu.vector_store %arg2[%c0_8, %c0_9], %15 {strides = array<i32>} : memref<2x1xi32, #tpu.memory_space<vmem>>, vector<2x1xi32>,
    return
  }
}

</mosaic_0001>

<llo_original>
// kernel: _predict.1
$region0: #{_predict.1}
  #allocation0 [shape = 'u32[]', space=smem, size = 0x4, offset = 0x4, fixed_abs, tag = 'smem constant byte address 0x4 - core index']
  #allocation1 [shape = 'u32[144,128]{1,0:T(1,128)}', space=vmem, size = 0x12000, scoped, tag = 'internal scratch']
  %s0 = inlined_call_operand.vmem [shape: f32[2,8,32], index: 0, kind: input, shape index: {}]
  %s1 = inlined_call_operand.vmem [shape: f32[33,8], index: 1, kind: input, shape index: {}]
  %s2 = inlined_call_operand.vmem [shape: s32[2,1], index: 2, kind: output, shape index: {}]
  %s3 = sld [smem:[#allocation0]]
  $region18: #{_predict.1} parent=0
    _
  %s5 = ssub.s32 1, %s3
  %s6 = scalar_select 0, %s5, %s3
  // Predicated region
  $region2: #{_predict.1} parent=0 // pred_check
    _
  $region3: #{_predict.1} parent=0 // pred_check_branch
    %8 = sbr.rel (0) target = $region5
  $region4: #{_predict.1} parent=0 // pred_region
    _
  $region5: #{_predict.1} parent=0 // pred_fallthru
    _
  // Predicated region
  $region6: #{_predict.1} parent=0 // pred_check
    _
  $region7: #{_predict.1} parent=0 // pred_check_branch
    %10 = sbr.rel (0) target = $region9
  $region8: #{_predict.1} parent=0 // pred_region
    _
  $region9: #{_predict.1} parent=0 // pred_fallthru
    _
  %v11 = vld [vmem:[%s0] sm:$0xff]
  %v12 = vld [vmem:[%s0 + $0x8] sm:$0xff]
  %vm13 = vcmask 261120
  %v14 = vsel %vm13, %v11, 0.0
  %v15 = vrot.slane %v14, 4
  %v16 = vadd.f32 %v14, %v15
  %v17 = vrot.slane %v16, 2
  %v18 = vadd.f32 %v16, %v17
  %v19 = vrot.slane %v18, 1
  %v20 = vadd.f32 %v18, %v19
  %v21 = vsel %vm13, %v12, 0.0
  %v22 = vrot.slane %v21, 4
  %v23 = vadd.f32 %v21, %v22
  %v24 = vrot.slane %v23, 2
  %v25 = vadd.f32 %v23, %v24
  %v26 = vrot.slane %v25, 1
  %v27 = vadd.f32 %v25, %v26
  %v28 = vld [vmem:[%s1] sm:$0xff]
  %v29 = vld [vmem:[%s1 + $0x8] sm:$0xff]
  %v30 = vld [vmem:[%s1 + $0x10] sm:$0xff]
  %v31 = vld [vmem:[%s1 + $0x18] sm:$0xff]
  %v32 = vld [vmem:[%s1 + $0x20] sm:$0x1]
  %v33 = vlaneseq
  %v34 = vshrl.u32 %v33, 7
  %v35 = vsub.s32 0, %v34
  %v36 = vrot.slane %v32, %v35
  %vm39 = vcmask 1041409
  %v40 = vsel %vm39, %v27, %v20
  %v41 = vsel %vm13, %v40, 0
  %43 = vmatprep.subr.mxu0 0.0
  %44 = vmatpush1.msra.mxu0 %v28
  %45 = vmatprep.subr.mxu0 0.0
  %46 = vmatpush1.msra.mxu0 %v29
  %47 = vmatprep.subr.mxu0 0.0
  %48 = vmatpush1.msra.mxu0 %v30
  %49 = vmatprep.subr.mxu0 0.0
  %50 = vmatpush1.msra.mxu0 %v31
  %51 = vmatprep.subr.mxu0 0.0
  %52 = vmatpush1.msra.mxu0 0.0
  %53 = vmatprep.subr.mxu0 0.0
  %54 = vmatpush1.msra.mxu0 0.0
  %55 = vmatprep.subr.mxu0 0.0
  %56 = vmatpush1.msra.mxu0 0.0
  %57 = vmatprep.subr.mxu0 0.0
  %58 = vmatpush1.msra.mxu0 0.0
  %59 = vmatprep.subr.mxu0 0.0
  %60 = vmatpush1.msra.mxu0 0.0
  %61 = vmatprep.subr.mxu0 0.0
  %62 = vmatpush1.msra.mxu0 0.0
  %63 = vmatprep.subr.mxu0 0.0
  %64 = vmatpush1.msra.mxu0 0.0
  %65 = vmatprep.subr.mxu0 0.0
  %66 = vmatpush1.msra.mxu0 0.0
  %67 = vmatprep.subr.mxu0 0.0
  %68 = vmatpush1.msra.mxu0 0.0
  %69 = vmatprep.subr.mxu0 0.0
  %70 = vmatpush1.msra.mxu0 0.0
  %71 = vmatprep.subr.mxu0 0.0
  %72 = vmatpush1.msra.mxu0 0.0
  %73 = vmatprep.subr.mxu0 0.0
  %74 = vmatpush1.msra.mxu0 0.0
  %75 = vmatprep.subr.mxu0 0.0
  %76 = vmatpush1.msra.mxu0 0.0
  %77 = vmatprep.subr.mxu0 0.0
  %78 = vmatpush1.msra.mxu0 0.0
  %79 = vmatprep.subr.mxu0 0.0
  %80 = vmatpush1.msra.mxu0 0.0
  %81 = vmatprep.subr.mxu0 0.0
  %82 = vmatpush1.msra.mxu0 0.0
  %83 = vmatprep.subr.mxu0 0.0
  %84 = vmatpush1.msra.mxu0 0.0
  %85 = vmatprep.subr.mxu0 0.0
  %86 = vmatpush1.msra.mxu0 0.0
  %87 = vmatprep.subr.mxu0 0.0
  %88 = vmatpush1.msra.mxu0 0.0
  %89 = vmatprep.subr.mxu0 0.0
  %90 = vmatpush1.msra.mxu0 0.0
  %91 = vmatprep.subr.mxu0 0.0
  %92 = vmatpush1.msra.mxu0 0.0
  %93 = vmatprep.subr.mxu0 0.0
  %94 = vmatpush1.msra.mxu0 0.0
  %95 = vmatprep.subr.mxu0 0.0
  %96 = vmatpush1.msra.mxu0 0.0
  %97 = vmatprep.subr.mxu0 0.0
  %98 = vmatpush1.msra.mxu0 0.0
  %99 = vmatprep.subr.mxu0 0.0
  %100 = vmatpush1.msra.mxu0 0.0
  %101 = vmatprep.subr.mxu0 0.0
  %102 = vmatpush1.msra.mxu0 0.0
  %103 = vmatprep.subr.mxu0 0.0
  %104 = vmatpush1.msra.mxu0 0.0
  %105 = vmatprep.subr.mxu0 0.0
  %106 = vmatpush1.msra.mxu0 0.0
  %107 = vmatprep.mubr.f32.mxu0 0.0
  %108 = vmatmul.mubr.f32.gmra.mrb[0].mxu0 %v41
  %v109 = vpop.f32.mrb[0].mxu0
  %v110 = vadd.f32 %v36, %v109
  %v111 = vpop.f32.mrb[0].mxu0
  %112 = vdwg.mxu0
  %vm113 = vcmask 58368
  %v114 = vsel %vm113, %v110, -inf
  %115 = vmax.xlane.f32.xlu0 %v114
  %v116 = vpop.xlane.xlu0 %115
  %v117 = vlaneseq
  %v118 = vand.u32 %v117, 127
  %vm119 = vcmp.eq.f32.partialorder %v110, %v116
  %v120 = vsel %vm119, %v118, 8
  %v121 = vsel %vm113, %v120, 2147483647
  %v122 = vand.u32 %v121, 65535
  %v123 = vshra.s32 %v121, 16
  %v124 = vcvt.s32.f32 %v122
  %v125 = vcvt.s32.f32 %v123
  %126 = vmin.xlane.f32.xlu0 %v125
  %v127 = vpop.xlane.xlu0 %126
  %vm128 = vcmp.eq.f32.partialorder %v125, %v127
  %v129 = vsel %vm128, %v124, inf
  %130 = vmin.xlane.f32.xlu0 %v129
  %v131 = vpop.xlane.xlu0 %130
  %v132 = vcvt.f32.s32 %v131
  %v133 = vcvt.f32.s32 %v127
  %v134 = vshll.u32 %v133, 16
  %v135 = vadd.s32 %v134, %v132
  %vm136 = vcmask 1024
  %137 = vst.msk [vmem:[%s2] sm:$0x3] %vm136, %v135
  // Predicated region
  $region10: #{_predict.1} parent=0 // pred_check
    _
  $region11: #{_predict.1} parent=0 // pred_check_branch
    %139 = sbr.rel (0) target = $region13
  $region12: #{_predict.1} parent=0 // pred_region
    _
  $region13: #{_predict.1} parent=0 // pred_fallthru
    _
  // Predicated region
  $region14: #{_predict.1} parent=0 // pred_check
    _
  $region15: #{_predict.1} parent=0 // pred_check_branch
    %141 = sbr.rel (0) target = $region17
  $region16: #{_predict.1} parent=0 // pred_region
    _
  $region17: #{_predict.1} parent=0 // pred_fallthru
    _

</llo_original>
